<compile_context>
chip_gen: v7x
topology: tpu7x:2x2x1
jax: 0.10.0
libtpu: 0.0.40
codegen_flags: <defaults>
</compile_context>

<pallas_src>
import functools

import jax
import jax.numpy as jnp
from jax.experimental import pallas as pl
from jax.experimental.pallas import tpu as pltpu


def _log_softmax(x):
    m = jnp.max(x, axis=1, keepdims=True)
    lse = m + jnp.log(jnp.sum(jnp.exp(x - m), axis=1, keepdims=True))
    return x - lse


def _ls_const_kernel(pred_ref, tgt_ref, out_ref, *, num_classes, smoothing,
                     n_rows, tile_n):
    """sim is None (== ones) or smoothing == 0: soft labels are constants."""
    i = pl.program_id(0)

    @pl.when(i == 0)
    def _init():
        out_ref[...] = jnp.zeros_like(out_ref)

    pred = pred_ref[...].astype(jnp.float32)                  # (T, C)
    tgt = tgt_ref[...]                                        # (T, 1) int32
    t, c = pred.shape

    col = jax.lax.broadcasted_iota(jnp.int32, (t, c), dimension=1)
    onehot = col == tgt

    scale = smoothing / (num_classes - 1)
    soft = jnp.where(onehot, jnp.float32(1.0 - smoothing), jnp.float32(scale))

    logp = _log_softmax(pred)
    row_loss = -jnp.sum(soft * logp, axis=1, keepdims=True)   # (T, 1)

    rows = i * tile_n + jax.lax.broadcasted_iota(jnp.int32, (t, 1), dimension=0)
    row_loss = jnp.where(rows < n_rows, row_loss, 0.0)        # mask padded rows
    out_ref[...] += jnp.sum(row_loss, axis=0, keepdims=True)


def _ls_sim_kernel(tgt_sref, pred_ref, tgt_ref, sim_hbm, out_ref,
                   sim_buf, sem, *, num_classes, smoothing, n_rows, tile_n):
    """General path: gather sim[target] rows straight from HBM inside the kernel."""
    i = pl.program_id(0)
    base = i * tile_n

    # Issue one small DMA per row of this tile; all copies are equal-sized and
    # signal the same semaphore, so waiting tile_n times below balances it.
    @pl.loop(0, tile_n)
    def _issue(r):
        row = tgt_sref[base + r]
        pltpu.make_async_copy(sim_hbm.at[pl.ds(row, 1), :],
                              sim_buf.at[pl.ds(r, 1), :],
                              sem.at[0]).start()

    @pl.when(i == 0)
    def _init():
        out_ref[...] = jnp.zeros_like(out_ref)

    pred = pred_ref[...].astype(jnp.float32)                  # (T, C)
    tgt = tgt_ref[...]                                        # (T, 1) int32
    t, c = pred.shape

    col = jax.lax.broadcasted_iota(jnp.int32, (t, c), dimension=1)
    onehot = col == tgt

    # log-softmax only needs pred; compute it while the row gather is in flight.
    logp = _log_softmax(pred)

    @pl.loop(0, tile_n)
    def _wait(r):
        pltpu.make_async_copy(sim_hbm.at[pl.ds(0, 1), :],
                              sim_buf.at[pl.ds(r, 1), :],
                              sem.at[0]).wait()

    sim_rows = sim_buf[...].astype(jnp.float32)               # (T, C)
    scale = jnp.float32(smoothing / (num_classes - 1))
    soft = jnp.where(onehot, 0.0, sim_rows * scale)
    true_lab = 1.0 - jnp.sum(soft, axis=1, keepdims=True)     # (T, 1)
    soft = jnp.where(onehot, true_lab, soft)

    row_loss = -jnp.sum(soft * logp, axis=1, keepdims=True)   # (T, 1)
    rows = base + jax.lax.broadcasted_iota(jnp.int32, (t, 1), dimension=0)
    row_loss = jnp.where(rows < n_rows, row_loss, 0.0)        # mask padded rows
    out_ref[...] += jnp.sum(row_loss, axis=0, keepdims=True)


def _pick_tile_n(n, c, itemsize):
    """Largest batch tile (multiple of 8, <=256) whose pred block is ~<=2 MiB so
    double-buffered inputs + f32 temporaries stay well inside the scoped VMEM
    limit on every generation (incl. v7x's 64 MiB physical VMEM)."""
    if n < 8:
        return n
    t = (2 * 1024 * 1024) // max(1, c * itemsize)
    t = max(8, min(256, (t // 8) * 8))
    return min(t, (n // 8) * 8)


def label_smoothing_loss(pred, target, *, num_classes, sim=None, smoothing=0.01):
    """JAX/Pallas port of LabelSmoothingLoss.forward (returns the batch mean)."""
    assert 0 <= smoothing < 1, f'smoothing ({smoothing}) should be between 0 and 1!'
    n, c = pred.shape
    assert c == num_classes
    smoothing = float(smoothing)

    tile_n = _pick_tile_n(n, c, pred.dtype.itemsize)
    num_tiles = (n + tile_n - 1) // tile_n
    n_pad = num_tiles * tile_n

    tgt = target.astype(jnp.int32)
    if n_pad > n:
        tgt = jnp.pad(tgt, (0, n_pad - n))     # padded rows masked in-kernel
    tgt2d = tgt.reshape(n_pad, 1)

    out_shape = jax.ShapeDtypeStruct((1, 1), jnp.float32)
    params = pltpu.CompilerParams(dimension_semantics=("arbitrary",))
    # TODO(synk): for vocab-scale C, add a second "arbitrary" grid axis over C
    # with an online logsumexp (flash-style) so blocks stay inside VMEM.

    if sim is None or smoothing == 0.0:
        # Constant soft labels: no (N, C) ones/zeros array is built or streamed.
        kernel = functools.partial(_ls_const_kernel, num_classes=num_classes,
                                   smoothing=smoothing, n_rows=n, tile_n=tile_n)
        total = pl.pallas_call(
            kernel,
            out_shape=out_shape,
            grid=(num_tiles,),
            in_specs=[pl.BlockSpec((tile_n, c), lambda i: (i, 0)),    # pred
                      pl.BlockSpec((tile_n, 1), lambda i: (i, 0))],   # target
            out_specs=pl.BlockSpec((1, 1), lambda i: (0, 0)),
            compiler_params=params,
        )(pred, tgt2d)
    else:
        # sim stays in HBM; its rows are gathered in-kernel via prefetched targets.
        kernel = functools.partial(_ls_sim_kernel, num_classes=num_classes,
                                   smoothing=smoothing, n_rows=n, tile_n=tile_n)
        grid_spec = pltpu.PrefetchScalarGridSpec(
            num_scalar_prefetch=1,
            grid=(num_tiles,),
            in_specs=[pl.BlockSpec((tile_n, c), lambda i, t: (i, 0)),   # pred
                      pl.BlockSpec((tile_n, 1), lambda i, t: (i, 0)),   # target
                      pl.BlockSpec(memory_space=pl.ANY)],               # sim (HBM)
            out_specs=pl.BlockSpec((1, 1), lambda i, t: (0, 0)),
            scratch_shapes=[pltpu.VMEM((tile_n, c), sim.dtype),
                            pltpu.SemaphoreType.DMA((1,))])
        total = pl.pallas_call(
            kernel,
            out_shape=out_shape,
            grid_spec=grid_spec,
            compiler_params=params,
        )(tgt, pred, tgt2d, sim)

    return total[0, 0] / n


def _reference(pred, target, *, num_classes, sim=None, smoothing=0.01):
    """Pure-JAX mirror of the PyTorch module."""
    pred = pred.astype(jnp.float32)
    logp = jax.nn.log_softmax(pred, axis=-1)
    sim_rows = (sim[target].astype(jnp.float32) if sim is not None
                else jnp.ones_like(pred))
    scale = smoothing / (num_classes - 1)
    onehot = jax.nn.one_hot(target, num_classes, dtype=jnp.float32) > 0
    soft = jnp.where(onehot, 0.0, sim_rows * scale)
    true_lab = 1.0 - jnp.sum(soft, axis=1, keepdims=True)
    soft = jnp.where(onehot, true_lab, soft)
    return jnp.mean(jnp.sum(-soft * logp, axis=-1))


if __name__ == "__main__":
    key = jax.random.PRNGKey(0)
    k1, k2, k3, k4, k5, k6 = jax.random.split(key, 6)

    # small case: batch=8, classes=32
    N, C = 8, 32
    pred = jax.random.normal(k1, (N, C), dtype=jnp.float32)
    target = jax.random.randint(k2, (N,), 0, C, dtype=jnp.int32)
    sim = jax.random.uniform(k3, (C, C), dtype=jnp.float32)

    loss = jax.block_until_ready(
        label_smoothing_loss(pred, target, num_classes=C, sim=sim, smoothing=0.01))
    ref = _reference(pred, target, num_classes=C, sim=sim, smoothing=0.01)
    assert jnp.allclose(loss, ref, atol=1e-4, rtol=1e-4), (loss, ref)

    loss2 = jax.block_until_ready(
        label_smoothing_loss(pred, target, num_classes=C, sim=None, smoothing=0.01))
    ref2 = _reference(pred, target, num_classes=C, sim=None, smoothing=0.01)
    assert jnp.allclose(loss2, ref2, atol=1e-4, rtol=1e-4), (loss2, ref2)

    loss3 = jax.block_until_ready(
        label_smoothing_loss(pred, target, num_classes=C, sim=sim, smoothing=0.0))
    ref3 = _reference(pred, target, num_classes=C, sim=sim, smoothing=0.0)
    assert jnp.allclose(loss3, ref3, atol=1e-4, rtol=1e-4), (loss3, ref3)

    # multi-tile case with a ragged batch (exercises masking + accumulation)
    N2, C2 = 20, 128
    pred2 = jax.random.normal(k4, (N2, C2), dtype=jnp.float32)
    target2 = jax.random.randint(k5, (N2,), 0, C2, dtype=jnp.int32)
    sim2 = jax.random.uniform(k6, (C2, C2), dtype=jnp.float32)

    loss4 = jax.block_until_ready(
        label_smoothing_loss(pred2, target2, num_classes=C2, sim=sim2, smoothing=0.05))
    ref4 = _reference(pred2, target2, num_classes=C2, sim=sim2, smoothing=0.05)
    assert jnp.allclose(loss4, ref4, atol=1e-4, rtol=1e-4), (loss4, ref4)

    loss5 = jax.block_until_ready(
        label_smoothing_loss(pred2, target2, num_classes=C2, sim=None, smoothing=0.05))
    ref5 = _reference(pred2, target2, num_classes=C2, sim=None, smoothing=0.05)
    assert jnp.allclose(loss5, ref5, atol=1e-4, rtol=1e-4), (loss5, ref5)

    print("KERNEL_OK")
</pallas_src>

<mosaic_0001>
module attributes {stable_mosaic.version = 11 : i64} {
  func.func @_ls_sim_kernel(%arg0: i32, %arg1: memref<8xi32, #tpu.memory_space<smem>>, %arg2: memref<8x32xf32, #tpu.memory_space<vmem>>, %arg3: memref<8x1xi32, #tpu.memory_space<vmem>>, %arg4: memref<32x32xf32, #tpu.memory_space<any>>, %arg5: memref<1x1xf32, #tpu.memory_space<vmem>>, %arg6: memref<8x32xf32, #tpu.memory_space<vmem>>, %arg7: memref<1x!tpu.dma_semaphore, #tpu.memory_space<semaphore_mem>>) attributes {dimension_semantics = [#tpu.dimension_semantics<arbitrary>], iteration_bounds = array<i64: 1>, scalar_prefetch = 1 : i64, scratch_operands = 2 : i64, tpu.core_type = #tpu.core_type<tc>, window_params = [{transform_indices = @transform_0, window_bounds = array<i64: 8, 32>}, {transform_indices = @transform_1, window_bounds = array<i64: 8, 1>}, {}, {pipeline_mode = #tpu.pipeline_mode<synchronous>, transform_indices = @transform_3, window_bounds = array<i64: 1, 1>}]} {
    %c8_i32 = arith.constant 8 : i32
    %0 = arith.muli %arg0, %c8_i32 : i32
    %c0_i32 = arith.constant 0 : i32
    %c8_i32_0 = arith.constant 8 : i32
    %1 = arith.addi %c0_i32, %c8_i32_0 : i32
    %c1_i32 = arith.constant 1 : i32
    scf.for %arg8 = %c0_i32 to %1 step %c1_i32  : i32 {
      %c1_i32_27 = arith.constant 1 : i32
      %51 = arith.muli %arg8, %c1_i32_27 : i32
      %c0_i32_28 = arith.constant 0 : i32
      %52 = arith.addi %c0_i32_28, %51 : i32
      %53 = arith.addi %0, %52 : i32
      %54 = arith.index_cast %53 : i32 to index
      %55 = memref.load %arg1[%54] : memref<8xi32, #tpu.memory_space<smem>>
      %c0_i32_29 = arith.constant 0 : i32
      %c0_i32_30 = arith.constant 0 : i32
      %56 = tpu.memref_slice %arg4[%55, %c0_i32_30] : memref<32x32xf32, #tpu.memory_space<any>> -> memref<1x32xf32, #tpu.memory_space<any>>
      %c0_i32_31 = arith.constant 0 : i32
      %57 = tpu.memref_slice %arg6[%52, %c0_i32_31] : memref<8x32xf32, #tpu.memory_space<vmem>> -> memref<1x32xf32, #tpu.memory_space<vmem>>
      %58 = tpu.memref_slice %arg7[%c0_i32_29] : memref<1x!tpu.dma_semaphore, #tpu.memory_space<semaphore_mem>> -> memref<1x!tpu.dma_semaphore, #tpu.memory_space<semaphore_mem>>
      %59 = tpu.memref_squeeze %58 : memref<1x!tpu.dma_semaphore, #tpu.memory_space<semaphore_mem>> -> memref<!tpu.dma_semaphore, #tpu.memory_space<semaphore_mem>>
      tpu.enqueue_dma source(%56 : memref<1x32xf32, #tpu.memory_space<any>>) target(%57 : memref<1x32xf32, #tpu.memory_space<vmem>>) target_semaphore(%59 : memref<!tpu.dma_semaphore, #tpu.memory_space<semaphore_mem>>)
    }
    %c8_i32_1 = arith.constant 8 : i32
    %c0_i32_2 = arith.constant 0 : i32
    %2 = arith.cmpi eq, %arg0, %c0_i32_2 : i32
    %3 = arith.extui %2 : i1 to i32
    %c0_i32_3 = arith.constant 0 : i32
    %4 = arith.cmpi ne, %3, %c0_i32_3 : i32
    scf.if %4 {
      %cst_27 = arith.constant 0.000000e+00 : f32
      %51 = vector.broadcast %cst_27 : f32 to vector<1x1xf32>
      %c0_28 = arith.constant 0 : index
      %c0_29 = arith.constant 0 : index
      %52 = vector.load %arg5[%c0_28, %c0_29] : memref<1x1xf32, #tpu.memory_space<vmem>>, vector<1x1xf32>
      tpu.vector_store %arg5[%c0_28, %c0_29], %51 {strides = array<i32>} : memref<1x1xf32, #tpu.memory_space<vmem>>, vector<1x1xf32>,
    } else {
    }
    %c0 = arith.constant 0 : index
    %c0_4 = arith.constant 0 : index
    %5 = vector.load %arg2[%c0, %c0_4] : memref<8x32xf32, #tpu.memory_space<vmem>>, vector<8x32xf32>
    %c0_5 = arith.constant 0 : index
    %c0_6 = arith.constant 0 : index
    %6 = vector.load %arg3[%c0_5, %c0_6] : memref<8x1xi32, #tpu.memory_space<vmem>>, vector<8x1xi32>
    %7 = tpu.iota {dimensions = array<i32: 1>} : vector<8x32xi32>
    %8 = vector.broadcast %6 : vector<8x1xi32> to vector<8x32xi32>
    %9 = arith.cmpi eq, %7, %8 : vector<8x32xi32>
    %cst = arith.constant dense<0xFF800000> : vector<8xf32>
    %10 = vector.multi_reduction <maximumf>, %5, %cst [1] : vector<8x32xf32> to vector<8xf32>
    %11 = vector.shape_cast %10 : vector<8xf32> to vector<8x1xf32>
    %12 = vector.broadcast %11 : vector<8x1xf32> to vector<8x32xf32>
    %13 = arith.subf %5, %12 : vector<8x32xf32>
    %14 = math.exp %13 : vector<8x32xf32>
    %cst_7 = arith.constant dense<0.000000e+00> : vector<8xf32>
    %15 = vector.multi_reduction <add>, %14, %cst_7 [1] : vector<8x32xf32> to vector<8xf32>
    %16 = vector.shape_cast %15 : vector<8xf32> to vector<8x1xf32>
    %17 = math.log %16 : vector<8x1xf32>
    %18 = arith.addf %11, %17 : vector<8x1xf32>
    %19 = vector.broadcast %18 : vector<8x1xf32> to vector<8x32xf32>
    %20 = arith.subf %5, %19 : vector<8x32xf32>
    %c0_i32_8 = arith.constant 0 : i32
    %c8_i32_9 = arith.constant 8 : i32
    %21 = arith.addi %c0_i32_8, %c8_i32_9 : i32
    %c1_i32_10 = arith.constant 1 : i32
    scf.for %arg8 = %c0_i32_8 to %21 step %c1_i32_10  : i32 {
      %c1_i32_27 = arith.constant 1 : i32
      %51 = arith.muli %arg8, %c1_i32_27 : i32
      %c0_i32_28 = arith.constant 0 : i32
      %52 = arith.addi %c0_i32_28, %51 : i32
      %c0_i32_29 = arith.constant 0 : i32
      %c0_i32_30 = arith.constant 0 : i32
      %c0_i32_31 = arith.constant 0 : i32
      %53 = tpu.memref_slice %arg4[%c0_i32_30, %c0_i32_31] : memref<32x32xf32, #tpu.memory_space<any>> -> memref<1x32xf32, #tpu.memory_space<any>>
      %c0_i32_32 = arith.constant 0 : i32
      %54 = tpu.memref_slice %arg6[%52, %c0_i32_32] : memref<8x32xf32, #tpu.memory_space<vmem>> -> memref<1x32xf32, #tpu.memory_space<vmem>>
      %55 = tpu.memref_slice %arg7[%c0_i32_29] : memref<1x!tpu.dma_semaphore, #tpu.memory_space<semaphore_mem>> -> memref<1x!tpu.dma_semaphore, #tpu.memory_space<semaphore_mem>>
      %56 = tpu.memref_squeeze %55 : memref<1x!tpu.dma_semaphore, #tpu.memory_space<semaphore_mem>> -> memref<!tpu.dma_semaphore, #tpu.memory_space<semaphore_mem>>
      tpu.wait_dma2 semaphore(%56 : memref<!tpu.dma_semaphore, #tpu.memory_space<semaphore_mem>>) src(%53 : memref<1x32xf32, #tpu.memory_space<any>>) dst(%54 : memref<1x32xf32, #tpu.memory_space<vmem>>)
    }
    %c8_i32_11 = arith.constant 8 : i32
    %c0_12 = arith.constant 0 : index
    %c0_13 = arith.constant 0 : index
    %22 = vector.load %arg6[%c0_12, %c0_13] : memref<8x32xf32, #tpu.memory_space<vmem>>, vector<8x32xf32>
    %cst_14 = arith.constant 3.22580658E-4 : f32
    %23 = vector.broadcast %cst_14 : f32 to vector<8x32xf32>
    %24 = arith.mulf %22, %23 : vector<8x32xf32>
    %cst_15 = arith.constant 0.000000e+00 : f32
    %25 = vector.broadcast %cst_15 : f32 to vector<8x32xf32>
    %26 = arith.select %9, %25, %24 : vector<8x32xi1>, vector<8x32xf32>
    %cst_16 = arith.constant dense<0.000000e+00> : vector<8xf32>
    %27 = vector.multi_reduction <add>, %26, %cst_16 [1] : vector<8x32xf32> to vector<8xf32>
    %28 = vector.shape_cast %27 : vector<8xf32> to vector<8x1xf32>
    %cst_17 = arith.constant 1.000000e+00 : f32
    %29 = vector.broadcast %cst_17 : f32 to vector<8x1xf32>
    %30 = arith.subf %29, %28 : vector<8x1xf32>
    %31 = vector.shape_cast %30 : vector<8x1xf32> to vector<8x1xf32>
    %32 = vector.broadcast %31 : vector<8x1xf32> to vector<8x32xf32>
    %33 = arith.select %9, %32, %26 : vector<8x32xi1>, vector<8x32xf32>
    %34 = arith.mulf %33, %20 : vector<8x32xf32>
    %cst_18 = arith.constant dense<0.000000e+00> : vector<8xf32>
    %35 = vector.multi_reduction <add>, %34, %cst_18 [1] : vector<8x32xf32> to vector<8xf32>
    %36 = vector.shape_cast %35 : vector<8xf32> to vector<8x1xf32>
    %cst_19 = arith.constant 0.000000e+00 : f32
    %37 = vector.broadcast %cst_19 : f32 to vector<8x1xf32>
    %38 = arith.subf %37, %36 : vector<8x1xf32>
    %39 = tpu.iota {dimensions = array<i32: 0>} : vector<8x1xi32>
    %40 = vector.broadcast %0 : i32 to vector<8x1xi32>
    %41 = arith.addi %40, %39 : vector<8x1xi32>
    %c8_i32_20 = arith.constant 8 : i32
    %42 = vector.broadcast %c8_i32_20 : i32 to vector<8x1xi32>
    %43 = arith.cmpi slt, %41, %42 : vector<8x1xi32>
    %cst_21 = arith.constant 0.000000e+00 : f32
    %44 = vector.broadcast %cst_21 : f32 to vector<8x1xf32>
    %45 = arith.select %43, %38, %44 : vector<8x1xi1>, vector<8x1xf32>
    %c0_22 = arith.constant 0 : index
    %c0_23 = arith.constant 0 : index
    %46 = vector.load %arg5[%c0_22, %c0_23] : memref<1x1xf32, #tpu.memory_space<vmem>>, vector<1x1xf32>
    %cst_24 = arith.constant dense<0.000000e+00> : vector<1xf32>
    %47 = vector.multi_reduction <add>, %45, %cst_24 [0] : vector<8x1xf32> to vector<1xf32>
    %48 = vector.shape_cast %47 : vector<1xf32> to vector<1x1xf32>
    %49 = arith.addf %46, %48 : vector<1x1xf32>
    %c0_25 = arith.constant 0 : index
    %c0_26 = arith.constant 0 : index
    %50 = vector.load %arg5[%c0_25, %c0_26] : memref<1x1xf32, #tpu.memory_space<vmem>>, vector<1x1xf32>
    tpu.vector_store %arg5[%c0_25, %c0_26], %49 {strides = array<i32>} : memref<1x1xf32, #tpu.memory_space<vmem>>, vector<1x1xf32>,
    return
  }
  func.func @transform_0(%arg0: i32, %arg1: memref<8xi32, #tpu.memory_space<smem>>) -> (i32, i32) {
    %c0_i32 = arith.constant 0 : i32
    %c0_i32_0 = arith.constant 0 : i32
    return %arg0, %c0_i32 : i32, i32
  }
  func.func @transform_1(%arg0: i32, %arg1: memref<8xi32, #tpu.memory_space<smem>>) -> (i32, i32) {
    %c0_i32 = arith.constant 0 : i32
    %c0_i32_0 = arith.constant 0 : i32
    return %arg0, %c0_i32 : i32, i32
  }
  func.func @transform_3(%arg0: i32, %arg1: memref<8xi32, #tpu.memory_space<smem>>) -> (i32, i32) {
    %c0_i32 = arith.constant 0 : i32
    %c0_i32_0 = arith.constant 0 : i32
    %c0_i32_1 = arith.constant 0 : i32
    return %c0_i32, %c0_i32_0 : i32, i32
  }
}

</mosaic_0001>

<llo_original>
// kernel: tpu_custom_call.1
$region0: #{tpu_custom_call.1}
  #allocation0 [shape = 'u32[]', space=smem, size = 0x4, offset = 0x4, fixed_abs, tag = 'smem constant byte address 0x4 - core index']
  #allocation1 [shape = 'u32[144,128]{1,0:T(1,128)}', space=vmem, size = 0x12000, scoped, tag = 'internal scratch']
  #allocation2 [shape = 'f32[8,32]{1,0:T(8,128)}', space=vmem, size = 0x1000, scoped, tag = 'scratch operand']
  #allocation3 [shape = 's32[1]{0}', space=sflag, size = 0x4, scoped, tag = 'scratch operand']
  #allocation4 [shape = 's32[1]{0}', space=sflag, size = 0x4, scoped, tag = 'scoped memory for tpu_custom_call.1']
  #allocation5 [shape = 'u8[512]{0}', space=smem, size = 0x200, scoped, tag = 'prefetched SMEM operand 0']
  #allocation8 [shape = 's32[]', space=sflag, size = 0x4, offset = 0, fixed_abs, tag = 'sflag constant byte address 0x0 - dummy sync flag']
  #allocation9 [shape = 's32[]', space=sflag, size = 0x4, offset = 0, fixed_abs, tag = 'sflag constant byte address 0x0 - dummy sync flag']
  #allocation10 [shape = 'u32[]', space=smem, size = 0x4, offset = 0x44, fixed_abs, tag = 'smem constant byte address 0x44 - assertion arg 0']
  #allocation11 [shape = 'u32[]', space=smem, size = 0x4, offset = 0x48, fixed_abs, tag = 'smem constant byte address 0x48 - assertion arg 1']
  %s0 = inlined_call_operand.vmem [shape: s32[8], index: 0, kind: input, shape index: {}]
  %s1 = inlined_call_operand.vmem [shape: f32[8,32], index: 1, kind: input, shape index: {}]
  %s2 = inlined_call_operand.vmem [shape: s32[8,1], index: 2, kind: input, shape index: {}]
  %s3 = inlined_call_operand.hbm [shape: f32[32,32], index: 3, kind: input, shape index: {}]
  %s4 = inlined_call_operand.hbm [shape: f32[1,1], index: 4, kind: output, shape index: {}]
  %s5 = sld [smem:[#allocation0]]
  $region40: #{tpu_custom_call.1} parent=0
    _
  %s7 = ssub.s32 1, %s5
  %s8 = scalar_select 0, %s7, %s5
  %s9 = sshll.u32 %s0, 4
  %s10 = int_to_ptr.vmem [resolvable:$true] %s9
  %12 = dma.vmem_to_smem %s10, 16, [#allocation5], [#allocation4]
  %13 = dma.done [#allocation4], 16
  %14 = sfence
  $region1: #{tpu_custom_call.1} parent=0
    #allocation6 [shape = 'u8[512]{0}', space=vmem, size = 0x400, scoped, tag = 'output window, operand 0, single buffered']
    #allocation7 [shape = 's32[1]{0}', space=sflag, size = 0x4, scoped, tag = 'scoped memory for tpu_custom_call.1']
    %15 = vsyncpa [#allocation7], 0
    // Predicated region
    $region2: #{tpu_custom_call.1} parent=1 // pred_check
      _
    $region3: #{tpu_custom_call.1} parent=1 // pred_check_branch
      %17 = sbr.rel (0) target = $region5
    $region4: #{tpu_custom_call.1} parent=1 // pred_region
      _
    $region5: #{tpu_custom_call.1} parent=1 // pred_fallthru
      _
    // Predicated region
    $region6: #{tpu_custom_call.1} parent=1 // pred_check
      _
    $region7: #{tpu_custom_call.1} parent=1 // pred_check_branch
      %19 = sbr.rel (0) target = $region9
    $region8: #{tpu_custom_call.1} parent=1 // pred_region
      _
    $region9: #{tpu_custom_call.1} parent=1 // pred_fallthru
      _
    %s20 = smul.u32 0, 8
    loop: start=0, step=1, limit=8
    $region10: #{tpu_custom_call.1} parent=1 // loop_pre_header
      _
    $region11: #{tpu_custom_call.1} parent=1 // loop_header
      %s22 = sphi 0, %s26
      %p23 = scmp.ge.s32.totalorder %s22, 8
    $region12: #{tpu_custom_call.1} parent=1 // loop_header_branch
      %25 = sbr.rel (%p23) target = $region16
    $region13: #{tpu_custom_call.1} parent=1 // loop_body
      %s27 = sadd.s32 %s20, %s22
      %s28 = sld [smem:[#allocation5 + %s27]]
      %s29 = smul.addr %s28, 16
      %s30 = scalar_lea.hbm %s3, %s29
      %s31 = scalar_lea.vmem [#allocation2], %s22
      // Predicated region
      $region17: #{tpu_custom_call.1} parent=13 // pred_check
        _
      $region18: #{tpu_custom_call.1} parent=13 // pred_check_branch
        %33 = sbr.rel target = $region20
      $region19: #{tpu_custom_call.1} parent=13 // pred_region
        %34 = sst [smem:[#allocation10]] [#allocation9]
        %35 = sst [smem:[#allocation11]] [#allocation8]
      $region20: #{tpu_custom_call.1} parent=13 // pred_fallthru
        _
      %37 = shalt.err (0)
      %s39 = sshll.u32 %s31, 4
      %s40 = int_to_ptr.vmem [resolvable:$true] %s39
      %42 = dma.hbm_to_vmem [thread:$0]  %s30, 16, %s40, [#allocation3]
    $region14: #{tpu_custom_call.1} parent=1 // loop_footer
      %s26 = sadd.s32 1, %s22
    $region15: #{tpu_custom_call.1} parent=1 // loop_footer_branch
      %21 = sbr.rel target = $region11
    $region16: #{tpu_custom_call.1} parent=1 // loop_exit
      _
    %p43 = scmp.eq.s32.totalorder 0, 0
    // Predicated region
    $region21: #{tpu_custom_call.1} parent=1 // pred_check
      %p44 = pneg %p43
    $region22: #{tpu_custom_call.1} parent=1 // pred_check_branch
      %46 = sbr.rel (%p44) target = $region24
    $region23: #{tpu_custom_call.1} parent=1 // pred_region
      %vm47 = vcmask 0
      %48 = vst.msk [vmem:[#allocation6] sm:$0x1] %vm47, 0.0
    $region24: #{tpu_custom_call.1} parent=1 // pred_fallthru
      _
    %v49 = vld [vmem:[%s1] sm:$0xff]
    %v50 = vld [vmem:[%s2] sm:$0xff]
    %v51 = vlaneseq
    %v52 = vand.u32 %v51, 127
    %53 = vset.pattern.permute.xlu0 0
    %54 = vperm.xlu0 %53, %v50
    %v55 = vpop.permute.xlu0 %54
    %vm56 = vcmp.eq.s32.totalorder %v52, %v55
    %vm57 = vcmask 261120
    %v58 = vsel %vm57, %v49, -inf
    %59 = vmax.xlane.f32.xlu0 %v58
    %v60 = vpop.xlane.xlu0 %59
    %v61 = vsub.f32 %v49, %v60
    %v62 = vmul.f32 %v61, 1.442695
    %v63 = vpow.pop %v62
    %v64 = vsel %vm57, %v63, 0.0
    %65 = vadd.xlane.f32.xlu0 %v64
    %v66 = vpop.xlane.xlu0 %65
    %v67 = vlog2.pop %v66
    %v68 = vmul.f32 %v67, 0.6931472
    %v69 = vadd.f32 %v60, %v68
    %v70 = vsub.f32 %v49, %v69
    loop: start=0, step=1, limit=8
    $region25: #{tpu_custom_call.1} parent=1 // loop_pre_header
      _
    $region26: #{tpu_custom_call.1} parent=1 // loop_header
      %s72 = sphi 0, %s76
      %p73 = scmp.ge.s32.totalorder %s72, 8
    $region27: #{tpu_custom_call.1} parent=1 // loop_header_branch
      %75 = sbr.rel (%p73) target = $region31
    $region28: #{tpu_custom_call.1} parent=1 // loop_body
      %s77 = smul.u32 1, 1
      %s78 = sshll.u32 %s77, 4
      %79 = dma.done [#allocation3], %s78
    $region29: #{tpu_custom_call.1} parent=1 // loop_footer
      %s76 = sadd.s32 1, %s72
    $region30: #{tpu_custom_call.1} parent=1 // loop_footer_branch
      %71 = sbr.rel target = $region26
    $region31: #{tpu_custom_call.1} parent=1 // loop_exit
      _
    %v80 = vld [vmem:[#allocation2] sm:$0xff]
    %v81 = vmul.f32 %v80, 0.00032258066
    %v82 = vsel %vm56, 0.0, %v81
    %v83 = vsel %vm57, %v82, 0.0
    %84 = vadd.xlane.f32.xlu0 %v83
    %v85 = vpop.xlane.xlu0 %84
    %v86 = vsub.f32 1.0, %v85
    %v87 = vsel %vm56, %v86, %v81
    %v88 = vmul.f32 %v87, %v70
    %v89 = vsel %vm57, %v88, 0.0
    %90 = vadd.xlane.f32.xlu0 %v89
    %v91 = vpop.xlane.xlu0 %90
    %v92 = vsub.f32 0.0, %v91
    %v93 = vlaneseq
    %v94 = vshrl.u32 %v93, 7
    %v95 = vstv %s20
    %v96 = vadd.s32 %v95, %v94
    %vm97 = vcmp.lt.s32.totalorder %v96, 8
    %v98 = vsel %vm97, %v92, 0.0
    %v99 = vld [vmem:[#allocation6] sm:$0x1]
    %v100 = vrot.slane %v98, 4
    %v101 = vadd.f32 %v98, %v100
    %v102 = vrot.slane %v101, 2
    %v103 = vadd.f32 %v101, %v102
    %v104 = vrot.slane %v103, 1
    %v105 = vadd.f32 %v103, %v104
    %v106 = vadd.f32 %v99, %v105
    %vm107 = vcmask 0
    %108 = vst.msk [vmem:[#allocation6] sm:$0x1] %vm107, %v106
    // Predicated region
    $region32: #{tpu_custom_call.1} parent=1 // pred_check
      _
    $region33: #{tpu_custom_call.1} parent=1 // pred_check_branch
      %110 = sbr.rel (0) target = $region35
    $region34: #{tpu_custom_call.1} parent=1 // pred_region
      %s112 = ssub.s32 16, 16
      %113 = vsyncadd [#allocation7], %s112
      %s115 = sshll.u32 [#allocation6], 4
      %s116 = int_to_ptr.vmem [resolvable:$true] %s115
      %118 = dma.vmem_to_hbm [thread:$0]  %s116, 16, %s4, [#allocation7]
    $region35: #{tpu_custom_call.1} parent=1 // pred_fallthru
      _
    // Predicated region
    $region36: #{tpu_custom_call.1} parent=1 // pred_check
      _
    $region37: #{tpu_custom_call.1} parent=1 // pred_check_branch
      %120 = sbr.rel (0) target = $region39
    $region38: #{tpu_custom_call.1} parent=1 // pred_region
      %121 = dma.done [#allocation7], 16
    $region39: #{tpu_custom_call.1} parent=1 // pred_fallthru
      _
    %122 = vsyncpa [#allocation7], 1
  %123 = vsyncmov [#allocation3]
  %s124 = vpop.sfrf %123
  %p125 = scmp.eq.s32.totalorder %s124, 0
  %p126 = pneg %p125
  %128 = shalt.err (%p126)

</llo_original>
